<compile_context>
chip_gen: v5e
topology: v5e:2x2
jax: 0.10.0
libtpu: 0.0.40
codegen_flags: <defaults>
</compile_context>

<pallas_src>
import math

import jax
import jax.numpy as jnp
import numpy as np
from jax.experimental import pallas as pl
from jax.experimental.pallas import tpu as pltpu

D_MODEL = 128
MAX_LEN = 5000


def build_pe_table(max_len=MAX_LEN, d_model=D_MODEL, dtype=jnp.float32):
    """Replicates the PyTorch register_buffer: pe of shape [max_len, 1, d_model]."""
    position = jnp.arange(max_len, dtype=jnp.float32)[:, None]
    div_term = jnp.exp(jnp.arange(0, d_model, 2, dtype=jnp.float32)
                       * (-math.log(10000.0) / d_model))
    angles = position * div_term                        # [max_len, d_model // 2]
    pe = jnp.zeros((max_len, d_model), jnp.float32)
    pe = pe.at[:, 0::2].set(jnp.sin(angles))
    pe = pe.at[:, 1::2].set(jnp.cos(angles))
    return pe[:, None, :].astype(dtype)                 # [max_len, 1, d_model]


def _pe_add_kernel(x_ref, pe_ref, o_ref):
    # x_ref/o_ref: [block_s, B*D]; pe_ref: [block_s, D] (f32).
    b = x_ref.shape[1] // pe_ref.shape[1]
    pe = pe_ref[...]
    if b > 1:
        # Lane-replicate pe across the folded batch: pure vreg copies (128-aligned
        # lane concat), no sublane broadcast, no extra HBM traffic.
        pe = jnp.concatenate([pe] * b, axis=1)
    o_ref[...] = (x_ref[...].astype(jnp.float32) + pe).astype(o_ref.dtype)


def _sublane(itemsize):
    return 8 if itemsize >= 4 else (16 if itemsize == 2 else 32)


def _target_x_block_bytes():
    """Generation-aware per-step x payload target."""
    try:
        info = pltpu.get_tpu_info()
        vmem_cap = int(getattr(info, "vmem_capacity_bytes", 128 << 20))
    except Exception:  # pragma: no cover - CPU interpret / older jax
        vmem_cap = 128 << 20
    # Small-VMEM / high-HBM-BW chips (v7x: 64 MiB, ~3.2 TB/s): use a larger per-step
    # payload so the ~0.35us grid-step overhead stays <10% of the step. 128 MiB-VMEM
    # chips (v5e/v6e) are already near roofline at ~4 MiB per block.
    return (6 << 20) if vmem_cap <= (96 << 20) else (4 << 20)


def _choose_block_s(S, B, D, itemsize):
    """Sequence-block rows; multiple of the sublane count, padded-footprint aware."""
    sub = _sublane(itemsize)
    if S <= sub:
        return S
    rows = max(sub, _target_x_block_bytes() // max(1, B * D * itemsize))
    rows = (rows // sub) * sub
    # Keep at least 2 grid steps when S is big enough so a 2-TC chip can split work.
    if S >= 2 * sub:
        half = -(-S // 2)                 # cdiv(S, 2)
        half = (-(-half // sub)) * sub    # round up to sublane multiple
        rows = min(rows, half)
    return int(min(rows, S))


def positional_encoding(x, pe_table, *, block_s=None, allow_fast_path=True,
                        donate_x=False):
    """x: [S, B, d_model]; pe_table: [max_len, 1, d_model] or [max_len, d_model]."""
    S, B, D = x.shape
    pe2d = pe_table.reshape(pe_table.shape[0], pe_table.shape[-1])
    max_len, Dp = pe2d.shape
    assert max_len >= S and Dp == D
    pe2d = pe2d.astype(jnp.float32)
    itemsize = x.dtype.itemsize
    sub = _sublane(itemsize)

    # Small-problem fast path: the fixed pallas_call/DMA-setup cost dominates any
    # kernel-level tuning for tiny inputs; also covers S < one sublane tile.
    if S < sub or (allow_fast_path and S * B * D * itemsize <= (32 << 10)):
        return (x.astype(jnp.float32) + pe2d[:S][:, None, :]).astype(x.dtype)

    # Fold batch into lanes: [S, B, D] -> [S, B*D] is a free contiguous reshape.
    x2d = x.reshape(S, B * D)

    if block_s is None:
        block_s = _choose_block_s(S, B, D, itemsize)
    grid = (pl.cdiv(S, block_s),)

    # Padded, double-buffered VMEM footprint of the pipeline (x + out + pe) x 2.
    bs_pad = (-(-block_s // sub)) * sub
    step_bytes = bs_pad * B * D * itemsize * 2 + bs_pad * D * 4
    vmem_limit = int(max(32 << 20, 2 * step_bytes + (4 << 20)))

    grid_spec = pltpu.PrefetchScalarGridSpec(
        num_scalar_prefetch=0,
        grid=grid,
        in_specs=[
            pl.BlockSpec((block_s, B * D), lambda i: (i, 0)),   # x rows (lane-dense)
            pl.BlockSpec((block_s, D), lambda i: (i, 0)),       # pe rows [:S]
        ],
        out_specs=pl.BlockSpec((block_s, B * D), lambda i: (i, 0)),
    )
    out2d = pl.pallas_call(
        _pe_add_kernel,
        out_shape=jax.ShapeDtypeStruct((S, B * D), x.dtype),
        grid_spec=grid_spec,
        compiler_params=pltpu.CompilerParams(
            dimension_semantics=("parallel",),
            vmem_limit_bytes=vmem_limit),
        input_output_aliases=({0: 0} if donate_x else {}),
    )(x2d, pe2d)
    return out2d.reshape(S, B, D)


if __name__ == "__main__":
    pe_table = build_pe_table()        # like the module's register_buffer (max_len=5000)
    keys = jax.random.split(jax.random.PRNGKey(0), 3)

    # 1) Small shape implied by the module (seq=8, batch=2, d_model=128); force the
    #    Pallas path so the kernel itself is exercised.
    S, B = 8, 2
    x = jax.random.normal(keys[0], (S, B, D_MODEL), dtype=jnp.float32)
    out = jax.block_until_ready(positional_encoding(x, pe_table, allow_fast_path=False))
    ref = x + pe_table[:S]
    assert out.shape == (S, B, D_MODEL)
    np.testing.assert_allclose(np.asarray(out), np.asarray(ref), rtol=1e-6, atol=1e-6)

    # 2) Multi-block pipelined path (grid > 1) with the default block heuristic.
    S2, B2 = 512, 4
    x2 = jax.random.normal(keys[1], (S2, B2, D_MODEL), dtype=jnp.float32)
    out2 = jax.block_until_ready(positional_encoding(x2, pe_table))
    ref2 = x2 + pe_table[:S2]
    np.testing.assert_allclose(np.asarray(out2), np.asarray(ref2), rtol=1e-6, atol=1e-6)

    # 3) bf16 activations: add runs in f32 in-kernel (matches PyTorch's f32 pe buffer).
    S3, B3 = 256, 2
    x3 = jax.random.normal(keys[2], (S3, B3, D_MODEL), dtype=jnp.float32).astype(jnp.bfloat16)
    out3 = jax.block_until_ready(positional_encoding(x3, pe_table))
    ref3 = (x3.astype(jnp.float32) + pe_table[:S3]).astype(jnp.bfloat16)
    np.testing.assert_allclose(np.asarray(out3.astype(jnp.float32)),
                               np.asarray(ref3.astype(jnp.float32)),
                               rtol=1e-2, atol=1e-2)

    print("KERNEL_OK")
</pallas_src>

<mosaic_0001>
module attributes {stable_mosaic.version = 11 : i64} {
  func.func @_pe_add_kernel(%arg0: i32, %arg1: memref<8x256xf32, #tpu.memory_space<vmem>>, %arg2: memref<8x128xf32, #tpu.memory_space<vmem>>, %arg3: memref<8x256xf32, #tpu.memory_space<vmem>>) attributes {dimension_semantics = [#tpu.dimension_semantics<parallel>], iteration_bounds = array<i64: 1>, scalar_prefetch = 0 : i64, scratch_operands = 0 : i64, tpu.core_type = #tpu.core_type<tc>, window_params = [{transform_indices = @transform_0, window_bounds = array<i64: 8, 256>}, {transform_indices = @transform_1, window_bounds = array<i64: 8, 128>}, {transform_indices = @transform_2, window_bounds = array<i64: 8, 256>}]} {
    %c0 = arith.constant 0 : index
    %c0_0 = arith.constant 0 : index
    %0 = vector.load %arg2[%c0, %c0_0] : memref<8x128xf32, #tpu.memory_space<vmem>>, vector<8x128xf32>
    %1 = tpu.concatenate %0, %0 in 1 : vector<8x128xf32>, vector<8x128xf32> -> vector<8x256xf32>
    %c0_1 = arith.constant 0 : index
    %c0_2 = arith.constant 0 : index
    %2 = vector.load %arg1[%c0_1, %c0_2] : memref<8x256xf32, #tpu.memory_space<vmem>>, vector<8x256xf32>
    %3 = arith.addf %2, %1 : vector<8x256xf32>
    %c0_3 = arith.constant 0 : index
    %c0_4 = arith.constant 0 : index
    %4 = vector.load %arg3[%c0_3, %c0_4] : memref<8x256xf32, #tpu.memory_space<vmem>>, vector<8x256xf32>
    tpu.vector_store %arg3[%c0_3, %c0_4], %3 {strides = array<i32>} : memref<8x256xf32, #tpu.memory_space<vmem>>, vector<8x256xf32>,
    return
  }
  func.func @transform_0(%arg0: i32) -> (i32, i32) {
    %c0_i32 = arith.constant 0 : i32
    %c0_i32_0 = arith.constant 0 : i32
    return %arg0, %c0_i32 : i32, i32
  }
  func.func @transform_1(%arg0: i32) -> (i32, i32) {
    %c0_i32 = arith.constant 0 : i32
    %c0_i32_0 = arith.constant 0 : i32
    return %arg0, %c0_i32 : i32, i32
  }
  func.func @transform_2(%arg0: i32) -> (i32, i32) {
    %c0_i32 = arith.constant 0 : i32
    %c0_i32_0 = arith.constant 0 : i32
    return %arg0, %c0_i32 : i32, i32
  }
}

</mosaic_0001>

<llo_original>
// kernel: tpu_custom_call.1
$region0: #{tpu_custom_call.1}
  #allocation0 [shape = 'u32[]', space=smem, size = 0x4, offset = 0x4, fixed_abs, tag = 'smem constant byte address 0x4 - core index']
  #allocation1 [shape = 'u32[72,128]{1,0:T(1,128)}', space=vmem, size = 0x9000, scoped, tag = 'internal scratch']
  %s0 = inlined_call_operand.hbm [shape: f32[8,256], index: 0, kind: input, shape index: {}]
  %s1 = inlined_call_operand.hbm [shape: f32[5000,128], index: 1, kind: input, shape index: {}]
  %s2 = inlined_call_operand.hbm [shape: f32[8,256], index: 2, kind: output, shape index: {}]
  %s3 = sld [smem:[#allocation0]]
  $region26: #{tpu_custom_call.1} parent=0
    _
  %s5 = ssub.s32 1, %s3
  %s6 = scalar_select 0, %s5, %s3
  $region1: #{tpu_custom_call.1} parent=0
    #allocation2 [shape = 'u8[8192]{0}', space=vmem, size = 0x2000, scoped, tag = 'input window, operand 0, single buffered']
    #allocation3 [shape = 's32[1]{0}', space=sflag, size = 0x4, scoped, tag = 'scoped memory for tpu_custom_call.1']
    #allocation4 [shape = 's32[1]{0}', space=sflag, size = 0x4, scoped, tag = 'scoped memory for tpu_custom_call.1']
    #allocation5 [shape = 'u8[4096]{0}', space=vmem, size = 0x1000, scoped, tag = 'input window, operand 1, single buffered']
    #allocation6 [shape = 's32[1]{0}', space=sflag, size = 0x4, scoped, tag = 'scoped memory for tpu_custom_call.1']
    #allocation7 [shape = 'u8[8192]{0}', space=vmem, size = 0x2000, scoped, tag = 'output window, operand 0, single buffered']
    %7 = vsyncpa [#allocation3], 0
    %8 = vsyncpa [#allocation6], 0
    %9 = vsyncpa [#allocation4], 0
    // Predicated region
    $region2: #{tpu_custom_call.1} parent=1 // pred_check
      _
    $region3: #{tpu_custom_call.1} parent=1 // pred_check_branch
      %11 = sbr.rel (0) target = $region5
    $region4: #{tpu_custom_call.1} parent=1 // pred_region
      %13 = vsyncadd [#allocation3], 0
      %s15 = sshll.u32 %s0, 4
      %s16 = int_to_ptr.hbm [resolvable:$true] %s15
      %s17 = sshll.u32 [#allocation2], 4
      %s18 = int_to_ptr.vmem [resolvable:$true] %s17
      %20 = dma.hbm_to_vmem [thread:$0]  %s16, 256, %s18, [#allocation3]
    $region5: #{tpu_custom_call.1} parent=1 // pred_fallthru
      _
    // Predicated region
    $region6: #{tpu_custom_call.1} parent=1 // pred_check
      _
    $region7: #{tpu_custom_call.1} parent=1 // pred_check_branch
      %22 = sbr.rel (0) target = $region9
    $region8: #{tpu_custom_call.1} parent=1 // pred_region
      %24 = vsyncadd [#allocation6], 0
      %s26 = sshll.u32 %s1, 4
      %s27 = int_to_ptr.hbm [resolvable:$true] %s26
      %s28 = sshll.u32 [#allocation5], 4
      %s29 = int_to_ptr.vmem [resolvable:$true] %s28
      %31 = dma.hbm_to_vmem [thread:$0]  %s27, 128, %s29, [#allocation6]
    $region9: #{tpu_custom_call.1} parent=1 // pred_fallthru
      _
    // Predicated region
    $region10: #{tpu_custom_call.1} parent=1 // pred_check
      _
    $region11: #{tpu_custom_call.1} parent=1 // pred_check_branch
      %33 = sbr.rel (0) target = $region13
    $region12: #{tpu_custom_call.1} parent=1 // pred_region
      %35 = dma.done [#allocation3], 256
    $region13: #{tpu_custom_call.1} parent=1 // pred_fallthru
      _
    // Predicated region
    $region14: #{tpu_custom_call.1} parent=1 // pred_check
      _
    $region15: #{tpu_custom_call.1} parent=1 // pred_check_branch
      %37 = sbr.rel (0) target = $region17
    $region16: #{tpu_custom_call.1} parent=1 // pred_region
      %39 = dma.done [#allocation6], 128
    $region17: #{tpu_custom_call.1} parent=1 // pred_fallthru
      _
    %v40 = vld [vmem:[#allocation5] sm:$0xff]
    %v41 = vld [vmem:[#allocation2] sm:$0xff]
    %v42 = vld [vmem:[#allocation2 + $0x8] sm:$0xff]
    %v43 = vadd.f32 %v41, %v40
    %v44 = vadd.f32 %v42, %v40
    %45 = vst [vmem:[#allocation7] sm:$0xff] %v43
    %46 = vst [vmem:[#allocation7 + $0x8] sm:$0xff] %v44
    // Predicated region
    $region18: #{tpu_custom_call.1} parent=1 // pred_check
      _
    $region19: #{tpu_custom_call.1} parent=1 // pred_check_branch
      %48 = sbr.rel (0) target = $region21
    $region20: #{tpu_custom_call.1} parent=1 // pred_region
      %50 = vsyncadd [#allocation4], 0
      %s52 = sshll.u32 [#allocation7], 4
      %s53 = int_to_ptr.vmem [resolvable:$true] %s52
      %s54 = sshll.u32 %s2, 4
      %s55 = int_to_ptr.hbm [resolvable:$true] %s54
      %57 = dma.vmem_to_hbm [thread:$0]  %s53, 256, %s55, [#allocation4]
    $region21: #{tpu_custom_call.1} parent=1 // pred_fallthru
      _
    // Predicated region
    $region22: #{tpu_custom_call.1} parent=1 // pred_check
      _
    $region23: #{tpu_custom_call.1} parent=1 // pred_check_branch
      %59 = sbr.rel (0) target = $region25
    $region24: #{tpu_custom_call.1} parent=1 // pred_region
      %61 = dma.done [#allocation4], 256
    $region25: #{tpu_custom_call.1} parent=1 // pred_fallthru
      _
    %62 = vsyncpa [#allocation3], 1
    %63 = vsyncpa [#allocation6], 1
    %64 = vsyncpa [#allocation4], 1

</llo_original>
